<compile_context>
chip_gen: v7x
topology: tpu7x:2x2x1
jax: 0.10.0
libtpu: 0.0.40
codegen_flags: <defaults>
</compile_context>

<pallas_src>
import functools

import jax
import jax.numpy as jnp
import numpy as np
from jax.experimental import pallas as pl
from jax.experimental.pallas import tpu as pltpu


# ----------------------------- fused Pallas kernel --------------------------

def _fused_tcn_kernel(x_ref, w_ref, shift_ref, fcw1_ref, fcb1_ref, fcw2_ref,
                      fcb2_ref, o_ref, pad_ref, *, num_levels, K, T, C, TB,
                      PADMAX, KC_PAD):
    """One grid step handles TB batch elements end-to-end.

    x_ref:     (TB, T, C)           f32 input activations
    w_ref:     (2*L, KC_PAD, C)     bf16, BN-scale-folded im2col conv weights
                                    (rows >= K*C are zero lane-padding)
    shift_ref: (2*L, 1, C)          f32, folded conv-bias/BN shift
    fcw1_ref:  (C, H) bf16, fcb1_ref: (1, H) f32
    fcw2_ref:  (1, H) f32 (fc2 weight as a row)
    fcb2_ref:  (1,)   f32 in SMEM (fc2 bias scalar)
    o_ref:     (1, TB)              f32 output (batch on lanes)
    pad_ref:   (TB, PADMAX+T, C)    bf16 persistent scratch: causal left pad
                                    (rows [0, PADMAX)) + current activation.
    """
    h = x_ref[...].astype(jnp.float32)                     # (TB, T, C) f32

    # Zero the causal-pad rows of the persistent scratch (tiny, sublane
    # aligned since PADMAX is a multiple of 8).  Done unconditionally so it
    # is correct regardless of how grid steps are assigned to cores.
    if PADMAX > 0:
        pad_ref[:, 0:PADMAX, :] = jnp.zeros((TB, PADMAX, C), jnp.bfloat16)

    # Hoisted zero lane-block used to pad the im2col depth K*C up to KC_PAD
    # (lane-dense, unmasked MXU operands).
    lane_pad = KC_PAD - K * C
    zero_tap = (jnp.zeros((TB, T, lane_pad), jnp.bfloat16)
                if lane_pad > 0 else None)

    for lvl in range(num_levels):
        dil = 2 ** lvl
        res = h                                            # f32 residual
        cur = h
        for ci in range(2):                                # conv1 / conv2
            idx = 2 * lvl + ci
            w = w_ref[idx]                                 # (KC_PAD, C) bf16
            shift = shift_ref[idx]                         # (1, C)      f32
            # Single bf16 cast (C lanes) per conv; activation lives at rows
            # [PADMAX, PADMAX+T) of the padded scratch.
            pad_ref[:, PADMAX:PADMAX + T, :] = cur.astype(jnp.bfloat16)
            # im2col: tap j reads x[t - (K-1-j)*dil]; taps concat along lanes,
            # sliced straight out of the (already bf16) scratch.
            taps = [pad_ref[:, PADMAX - (K - 1 - j) * dil:
                               PADMAX - (K - 1 - j) * dil + T, :]
                    for j in range(K)]
            if zero_tap is not None:
                taps.append(zero_tap)
            cols = jnp.concatenate(taps, axis=2)           # (TB, T, KC_PAD)
            y = jnp.dot(cols.reshape(TB * T, KC_PAD), w,
                        preferred_element_type=jnp.float32)
            y = y + shift                                  # folded bias/BN shift
            cur = jnp.maximum(y, 0.0).reshape(TB, T, C)    # relu1 / relu2
        h = jnp.maximum(cur + res, 0.0)                    # residual + final relu

    # FC head on the last time step only (== x[:, :, -1] in NCL layout).
    x_last = h[:, T - 1, :]                                # (TB, C)
    hid = jnp.dot(x_last.astype(jnp.bfloat16), fcw1_ref[...],
                  preferred_element_type=jnp.float32) + fcb1_ref[...]
    hid = jnp.maximum(hid, 0.0)                            # fc1 + relu (dropout=id)
    # fc2 (H -> 1): VPU multiply + lane reduction instead of an N=1 MXU matmul.
    y = jnp.sum(hid * fcw2_ref[...], axis=-1, keepdims=True) + fcb2_ref[0]
    # Lane-dense store: batch on lanes.
    o_ref[...] = y.reshape(1, TB).astype(o_ref.dtype)


# ------------------------------- wrapper ------------------------------------

def _default_batch_tile(B, T):
    """Pick TB so each grid step has a healthy M = TB*T for the MXU."""
    if B <= 1:
        return 1
    # One big step beats splitting when the whole batch fits a ~512-row tile.
    if B * T <= 512:
        return B
    # Otherwise aim for TB*T ~ 256-512 rows per step (TB must divide B).
    tb = max(1, min(B, 512 // max(T, 1)))
    while B % tb != 0:
        tb -= 1
    # Never split into steps too small to keep the MXU busy.
    if tb * T < 256:
        return B
    return tb


def pack_params(params):
    """Fold BN into conv weights/shifts and stack everything for the kernel."""
    blocks = params["blocks"]
    K = params["kernel_size"]
    C = blocks[0]["w1"].shape[1]
    KC = K * C
    KC_PAD = ((KC + 127) // 128) * 128                 # lane-align contraction
    w_list, s_list = [], []
    for blk in blocks:
        for wn, sn, shn in (("w1", "scale1", "shift1"),
                            ("w2", "scale2", "shift2")):
            w = blk[wn].reshape(KC, C) * blk[sn][None, :]   # fold BN scale
            if KC_PAD > KC:
                w = jnp.concatenate(
                    [w, jnp.zeros((KC_PAD - KC, C), w.dtype)], axis=0)
            w_list.append(w.astype(jnp.bfloat16))
            s_list.append(blk[shn].reshape(1, C))
    fc = params["fc"]
    H = fc["w1"].shape[1]
    return dict(
        num_levels=len(blocks), K=K, C=C, H=H, KC_PAD=KC_PAD,
        w_all=jnp.stack(w_list, axis=0),          # (2L, KC_PAD, C) bf16
        shift_all=jnp.stack(s_list, axis=0),      # (2L, 1, C)      f32
        fcw1=fc["w1"].astype(jnp.bfloat16),       # (C, H)
        fcb1=fc["b1"].reshape(1, H),
        fcw2=fc["w2"].reshape(1, H),              # fc2 weight as a row
        fcb2=fc["b2"].reshape(1),                 # scalar bias (SMEM)
    )


def decoder_tcn_forward(x, packed, *, batch_tile=None):
    """x: (B, T, embed_dim) -> (B, 1).  Single fused pallas_call."""
    B, T, C = x.shape
    L = packed["num_levels"]
    K = packed["K"]
    H = packed["H"]
    KC_PAD = packed["KC_PAD"]
    assert packed["C"] == C

    TB = _default_batch_tile(B, T) if batch_tile is None else batch_tile
    assert B % TB == 0
    GB = B // TB
    pad_raw = (K - 1) * (2 ** (L - 1))
    PADMAX = ((pad_raw + 7) // 8) * 8 if pad_raw > 0 else 0   # aligned left pad

    # Rough per-step VMEM budget (live f32 activations + bf16 im2col/pad
    # scratch + double-buffered weights/inputs), clamped for v7x's 64 MiB VMEM.
    act_b = TB * T * C * 4
    est = (8 * act_b                                    # h/res/cur + temps
           + 2 * TB * T * KC_PAD * 2                    # bf16 im2col cols
           + TB * (PADMAX + T) * C * 2                  # persistent pad scratch
           + 2 * (2 * L * KC_PAD * C * 2 + 2 * L * C * 4 + C * H * 2)
           + 2 * act_b)                                 # double-buffered x
    vmem_limit = int(min(max(2 * est, 16 << 20), 48 << 20))

    kernel = functools.partial(_fused_tcn_kernel, num_levels=L, K=K, T=T, C=C,
                               TB=TB, PADMAX=PADMAX, KC_PAD=KC_PAD)

    out = pl.pallas_call(
        kernel,
        out_shape=jax.ShapeDtypeStruct((GB, 1, TB), x.dtype),
        grid=(GB,),
        in_specs=[
            pl.BlockSpec((TB, T, C), lambda b: (b, 0, 0)),            # x
            pl.BlockSpec((2 * L, KC_PAD, C), lambda b: (0, 0, 0)),    # conv W
            pl.BlockSpec((2 * L, 1, C), lambda b: (0, 0, 0)),         # shifts
            pl.BlockSpec((C, H), lambda b: (0, 0)),                   # fc1 W
            pl.BlockSpec((1, H), lambda b: (0, 0)),                   # fc1 b
            pl.BlockSpec((1, H), lambda b: (0, 0)),                   # fc2 W row
            pl.BlockSpec(memory_space=pltpu.MemorySpace.SMEM),        # fc2 b
        ],
        out_specs=pl.BlockSpec((pl.Squeezed(), 1, TB), lambda b: (b, 0, 0)),
        scratch_shapes=[pltpu.VMEM((TB, PADMAX + T, C), jnp.bfloat16)],
        compiler_params=pltpu.CompilerParams(
            dimension_semantics=("parallel",),
            vmem_limit_bytes=vmem_limit),
    )(x, packed["w_all"], packed["shift_all"], packed["fcw1"], packed["fcb1"],
      packed["fcw2"], packed["fcb2"])
    return out.reshape(B, 1)


# ----------------------- parameter construction -----------------------------

def _uniform(key, shape, bound):
    return jax.random.uniform(key, shape, jnp.float32, -bound, bound)


def init_params(key, embed_dim, num_levels, h_fc_dim, kernel_size):
    eps = 1e-5
    blocks = []
    for i in range(num_levels):
        dil = 2 ** i
        cin = cout = embed_dim
        k1, k2, k3, k4, key = jax.random.split(key, 5)
        bnd = 1.0 / np.sqrt(cin * kernel_size)
        # conv weights stored as (K, Cin, Cout) (== PyTorch weight[:, :, j].T per tap)
        w1 = _uniform(k1, (kernel_size, cin, cout), bnd)
        b1 = _uniform(k2, (cout,), bnd)
        w2 = _uniform(k3, (kernel_size, cout, cout), bnd)
        b2 = _uniform(k4, (cout,), bnd)
        # BatchNorm1d eval-mode defaults: gamma=1, beta=0, mean=0, var=1.
        gamma = jnp.ones((cout,), jnp.float32)
        beta = jnp.zeros((cout,), jnp.float32)
        rmean = jnp.zeros((cout,), jnp.float32)
        rvar = jnp.ones((cout,), jnp.float32)
        s = gamma / jnp.sqrt(rvar + eps)
        blocks.append(dict(
            dil=dil,
            w1=w1, scale1=s, shift1=(b1 - rmean) * s + beta,
            w2=w2, scale2=s, shift2=(b2 - rmean) * s + beta,
        ))
    k1, k2, k3, k4, key = jax.random.split(key, 5)
    bnd1 = 1.0 / np.sqrt(embed_dim)
    bnd2 = 1.0 / np.sqrt(h_fc_dim)
    fc = dict(
        w1=_uniform(k1, (embed_dim, h_fc_dim), bnd1),
        b1=_uniform(k2, (h_fc_dim,), bnd1),
        w2=_uniform(k3, (h_fc_dim, 1), bnd2),
        b2=_uniform(k4, (1,), bnd2),
    )
    return dict(blocks=blocks, fc=fc, kernel_size=kernel_size)


# --------------------------- pure-JAX reference ------------------------------

def _ref_causal_conv(x, w, dil):
    B, T, Cin = x.shape
    K, _, Cout = w.shape
    pad = (K - 1) * dil
    xp = jnp.pad(x, ((0, 0), (pad, 0), (0, 0)))
    acc = jnp.zeros((B, T, Cout), jnp.float32)
    for j in range(K):
        acc = acc + jnp.einsum("btc,co->bto",
                               xp[:, j * dil:j * dil + T, :], w[j])
    return acc


def ref_forward(x, params):
    h = x
    for blk in params["blocks"]:
        res = h
        o1 = _ref_causal_conv(h, blk["w1"], blk["dil"])
        o1 = jnp.maximum(o1 * blk["scale1"] + blk["shift1"], 0.0)   # relu1
        o2 = _ref_causal_conv(o1, blk["w2"], blk["dil"])
        o2 = jnp.maximum(o2 * blk["scale2"] + blk["shift2"], 0.0)   # relu2
        h = jnp.maximum(o2 + res, 0.0)                              # relu(out+res)
    x_last = h[:, -1, :]
    fc = params["fc"]
    hid = jnp.maximum(x_last @ fc["w1"] + fc["b1"], 0.0)
    return hid @ fc["w2"] + fc["b2"]


# ---------------------------------- main -------------------------------------

if __name__ == "__main__":
    B, T = 2, 16
    EMBED, LEVELS, HFC, KSIZE = 32, 2, 16, 3

    key = jax.random.PRNGKey(0)
    kx, kp = jax.random.split(key)
    x = jax.random.normal(kx, (B, T, EMBED), jnp.float32)
    params = init_params(kp, EMBED, LEVELS, HFC, KSIZE)
    packed = pack_params(params)

    out = decoder_tcn_forward(x, packed)
    out = jax.block_until_ready(out)

    ref = jax.block_until_ready(ref_forward(x, params))
    # Kernel matmuls run in bf16 (f32 accumulation); compare with matching tol.
    np.testing.assert_allclose(np.asarray(out), np.asarray(ref),
                               rtol=2e-2, atol=2e-2)
    assert out.shape == (B, 1)
    print("KERNEL_OK")
</pallas_src>

<mosaic_0001>
module attributes {stable_mosaic.version = 11 : i64} {
  func.func @_fused_tcn_kernel(%arg0: i32, %arg1: memref<2x16x32xf32, #tpu.memory_space<vmem>>, %arg2: memref<4x128x32xbf16, #tpu.memory_space<vmem>>, %arg3: memref<4x1x32xf32, #tpu.memory_space<vmem>>, %arg4: memref<32x16xbf16, #tpu.memory_space<vmem>>, %arg5: memref<1x16xf32, #tpu.memory_space<vmem>>, %arg6: memref<1x16xf32, #tpu.memory_space<vmem>>, %arg7: memref<1xf32, #tpu.memory_space<smem>>, %arg8: memref<1x1x2xf32, #tpu.memory_space<vmem>>, %arg9: memref<2x24x32xbf16, #tpu.memory_space<vmem>>) attributes {dimension_semantics = [#tpu.dimension_semantics<parallel>], iteration_bounds = array<i64: 1>, scalar_prefetch = 0 : i64, scratch_operands = 1 : i64, tpu.core_type = #tpu.core_type<tc>, window_params = [{transform_indices = @transform_0, window_bounds = array<i64: 2, 16, 32>}, {pipeline_mode = #tpu.pipeline_mode<synchronous>, transform_indices = @transform_1, window_bounds = array<i64: 4, 128, 32>}, {pipeline_mode = #tpu.pipeline_mode<synchronous>, transform_indices = @transform_2, window_bounds = array<i64: 4, 1, 32>}, {pipeline_mode = #tpu.pipeline_mode<synchronous>, transform_indices = @transform_3, window_bounds = array<i64: 32, 16>}, {pipeline_mode = #tpu.pipeline_mode<synchronous>, transform_indices = @transform_4, window_bounds = array<i64: 1, 16>}, {pipeline_mode = #tpu.pipeline_mode<synchronous>, transform_indices = @transform_5, window_bounds = array<i64: 1, 16>}, {transform_indices = @transform_6, window_bounds = array<i64: 1>}, {transform_indices = @transform_7, window_bounds = array<i64: 1, 1, 2>}]} {
    %c0 = arith.constant 0 : index
    %c0_0 = arith.constant 0 : index
    %c0_1 = arith.constant 0 : index
    %0 = vector.load %arg1[%c0, %c0_0, %c0_1] : memref<2x16x32xf32, #tpu.memory_space<vmem>>, vector<2x16x32xf32>
    %cst = arith.constant 0.000000e+00 : bf16
    %1 = vector.broadcast %cst : bf16 to vector<2x8x32xbf16>
    %c0_2 = arith.constant 0 : index
    %c0_3 = arith.constant 0 : index
    %c0_4 = arith.constant 0 : index
    %2 = vector.load %arg9[%c0_2, %c0_3, %c0_4] : memref<2x24x32xbf16, #tpu.memory_space<vmem>>, vector<2x8x32xbf16>
    tpu.vector_store %arg9[%c0_2, %c0_3, %c0_4], %1 {strides = array<i32>} : memref<2x24x32xbf16, #tpu.memory_space<vmem>>, vector<2x8x32xbf16>,
    %cst_5 = arith.constant 0.000000e+00 : bf16
    %3 = vector.broadcast %cst_5 : bf16 to vector<2x16x32xbf16>
    %c0_6 = arith.constant 0 : index
    %c0_7 = arith.constant 0 : index
    %c0_8 = arith.constant 0 : index
    %4 = vector.load %arg2[%c0_6, %c0_7, %c0_8] : memref<4x128x32xbf16, #tpu.memory_space<vmem>>, vector<1x128x32xbf16>
    %5 = vector.shape_cast %4 : vector<1x128x32xbf16> to vector<128x32xbf16>
    %c0_9 = arith.constant 0 : index
    %c0_10 = arith.constant 0 : index
    %c0_11 = arith.constant 0 : index
    %6 = vector.load %arg3[%c0_9, %c0_10, %c0_11] : memref<4x1x32xf32, #tpu.memory_space<vmem>>, vector<1x1x32xf32>
    %7 = vector.shape_cast %6 : vector<1x1x32xf32> to vector<1x32xf32>
    %8 = arith.truncf %0 : vector<2x16x32xf32> to vector<2x16x32xbf16>
    %c0_12 = arith.constant 0 : index
    %c8 = arith.constant 8 : index
    %c0_13 = arith.constant 0 : index
    %9 = vector.load %arg9[%c0_12, %c8, %c0_13] : memref<2x24x32xbf16, #tpu.memory_space<vmem>>, vector<2x16x32xbf16>
    tpu.vector_store %arg9[%c0_12, %c8, %c0_13], %8 {strides = array<i32>} : memref<2x24x32xbf16, #tpu.memory_space<vmem>>, vector<2x16x32xbf16>,
    %c0_14 = arith.constant 0 : index
    %c6 = arith.constant 6 : index
    %c0_15 = arith.constant 0 : index
    %10 = vector.load %arg9[%c0_14, %c6, %c0_15] : memref<2x24x32xbf16, #tpu.memory_space<vmem>>, vector<2x16x32xbf16>
    %c0_16 = arith.constant 0 : index
    %c7 = arith.constant 7 : index
    %c0_17 = arith.constant 0 : index
    %11 = vector.load %arg9[%c0_16, %c7, %c0_17] : memref<2x24x32xbf16, #tpu.memory_space<vmem>>, vector<2x16x32xbf16>
    %c0_18 = arith.constant 0 : index
    %c8_19 = arith.constant 8 : index
    %c0_20 = arith.constant 0 : index
    %12 = vector.load %arg9[%c0_18, %c8_19, %c0_20] : memref<2x24x32xbf16, #tpu.memory_space<vmem>>, vector<2x16x32xbf16>
    %13 = tpu.concatenate %10, %11, %12, %3 in 2 : vector<2x16x32xbf16>, vector<2x16x32xbf16>, vector<2x16x32xbf16>, vector<2x16x32xbf16> -> vector<2x16x128xbf16>
    %14 = vector.shape_cast %13 : vector<2x16x128xbf16> to vector<32x128xbf16>
    %cst_21 = arith.constant dense<0.000000e+00> : vector<32x32xf32>
    %15 = tpu.matmul %14, %5, %cst_21 {dimension_numbers = #tpu.dot_dimension_numbers<[1], [0], [0], [1], [0, 0, 1, 1], [], []>} : vector<32x128xbf16>, vector<128x32xbf16>, vector<32x32xf32> -> vector<32x32xf32>
    %16 = vector.broadcast %7 : vector<1x32xf32> to vector<32x32xf32>
    %17 = arith.addf %15, %16 : vector<32x32xf32>
    %cst_22 = arith.constant 0.000000e+00 : f32
    %18 = vector.broadcast %cst_22 : f32 to vector<32x32xf32>
    %19 = arith.maximumf %17, %18 : vector<32x32xf32>
    %20 = vector.shape_cast %19 : vector<32x32xf32> to vector<2x16x32xf32>
    %c1 = arith.constant 1 : index
    %c0_23 = arith.constant 0 : index
    %c0_24 = arith.constant 0 : index
    %21 = vector.load %arg2[%c1, %c0_23, %c0_24] : memref<4x128x32xbf16, #tpu.memory_space<vmem>>, vector<1x128x32xbf16>
    %22 = vector.shape_cast %21 : vector<1x128x32xbf16> to vector<128x32xbf16>
    %c1_25 = arith.constant 1 : index
    %c0_26 = arith.constant 0 : index
    %c0_27 = arith.constant 0 : index
    %23 = vector.load %arg3[%c1_25, %c0_26, %c0_27] : memref<4x1x32xf32, #tpu.memory_space<vmem>>, vector<1x1x32xf32>
    %24 = vector.shape_cast %23 : vector<1x1x32xf32> to vector<1x32xf32>
    %25 = arith.truncf %20 : vector<2x16x32xf32> to vector<2x16x32xbf16>
    %c0_28 = arith.constant 0 : index
    %c8_29 = arith.constant 8 : index
    %c0_30 = arith.constant 0 : index
    %26 = vector.load %arg9[%c0_28, %c8_29, %c0_30] : memref<2x24x32xbf16, #tpu.memory_space<vmem>>, vector<2x16x32xbf16>
    tpu.vector_store %arg9[%c0_28, %c8_29, %c0_30], %25 {strides = array<i32>} : memref<2x24x32xbf16, #tpu.memory_space<vmem>>, vector<2x16x32xbf16>,
    %c0_31 = arith.constant 0 : index
    %c6_32 = arith.constant 6 : index
    %c0_33 = arith.constant 0 : index
    %27 = vector.load %arg9[%c0_31, %c6_32, %c0_33] : memref<2x24x32xbf16, #tpu.memory_space<vmem>>, vector<2x16x32xbf16>
    %c0_34 = arith.constant 0 : index
    %c7_35 = arith.constant 7 : index
    %c0_36 = arith.constant 0 : index
    %28 = vector.load %arg9[%c0_34, %c7_35, %c0_36] : memref<2x24x32xbf16, #tpu.memory_space<vmem>>, vector<2x16x32xbf16>
    %c0_37 = arith.constant 0 : index
    %c8_38 = arith.constant 8 : index
    %c0_39 = arith.constant 0 : index
    %29 = vector.load %arg9[%c0_37, %c8_38, %c0_39] : memref<2x24x32xbf16, #tpu.memory_space<vmem>>, vector<2x16x32xbf16>
    %30 = tpu.concatenate %27, %28, %29, %3 in 2 : vector<2x16x32xbf16>, vector<2x16x32xbf16>, vector<2x16x32xbf16>, vector<2x16x32xbf16> -> vector<2x16x128xbf16>
    %31 = vector.shape_cast %30 : vector<2x16x128xbf16> to vector<32x128xbf16>
    %cst_40 = arith.constant dense<0.000000e+00> : vector<32x32xf32>
    %32 = tpu.matmul %31, %22, %cst_40 {dimension_numbers = #tpu.dot_dimension_numbers<[1], [0], [0], [1], [0, 0, 1, 1], [], []>} : vector<32x128xbf16>, vector<128x32xbf16>, vector<32x32xf32> -> vector<32x32xf32>
    %33 = vector.broadcast %24 : vector<1x32xf32> to vector<32x32xf32>
    %34 = arith.addf %32, %33 : vector<32x32xf32>
    %cst_41 = arith.constant 0.000000e+00 : f32
    %35 = vector.broadcast %cst_41 : f32 to vector<32x32xf32>
    %36 = arith.maximumf %34, %35 : vector<32x32xf32>
    %37 = vector.shape_cast %36 : vector<32x32xf32> to vector<2x16x32xf32>
    %38 = arith.addf %37, %0 : vector<2x16x32xf32>
    %cst_42 = arith.constant 0.000000e+00 : f32
    %39 = vector.broadcast %cst_42 : f32 to vector<2x16x32xf32>
    %40 = arith.maximumf %38, %39 : vector<2x16x32xf32>
    %c2 = arith.constant 2 : index
    %c0_43 = arith.constant 0 : index
    %c0_44 = arith.constant 0 : index
    %41 = vector.load %arg2[%c2, %c0_43, %c0_44] : memref<4x128x32xbf16, #tpu.memory_space<vmem>>, vector<1x128x32xbf16>
    %42 = vector.shape_cast %41 : vector<1x128x32xbf16> to vector<128x32xbf16>
    %c2_45 = arith.constant 2 : index
    %c0_46 = arith.constant 0 : index
    %c0_47 = arith.constant 0 : index
    %43 = vector.load %arg3[%c2_45, %c0_46, %c0_47] : memref<4x1x32xf32, #tpu.memory_space<vmem>>, vector<1x1x32xf32>
    %44 = vector.shape_cast %43 : vector<1x1x32xf32> to vector<1x32xf32>
    %45 = arith.truncf %40 : vector<2x16x32xf32> to vector<2x16x32xbf16>
    %c0_48 = arith.constant 0 : index
    %c8_49 = arith.constant 8 : index
    %c0_50 = arith.constant 0 : index
    %46 = vector.load %arg9[%c0_48, %c8_49, %c0_50] : memref<2x24x32xbf16, #tpu.memory_space<vmem>>, vector<2x16x32xbf16>
    tpu.vector_store %arg9[%c0_48, %c8_49, %c0_50], %45 {strides = array<i32>} : memref<2x24x32xbf16, #tpu.memory_space<vmem>>, vector<2x16x32xbf16>,
    %c0_51 = arith.constant 0 : index
    %c4 = arith.constant 4 : index
    %c0_52 = arith.constant 0 : index
    %47 = vector.load %arg9[%c0_51, %c4, %c0_52] : memref<2x24x32xbf16, #tpu.memory_space<vmem>>, vector<2x16x32xbf16>
    %c0_53 = arith.constant 0 : index
    %c6_54 = arith.constant 6 : index
    %c0_55 = arith.constant 0 : index
    %48 = vector.load %arg9[%c0_53, %c6_54, %c0_55] : memref<2x24x32xbf16, #tpu.memory_space<vmem>>, vector<2x16x32xbf16>
    %c0_56 = arith.constant 0 : index
    %c8_57 = arith.constant 8 : index
    %c0_58 = arith.constant 0 : index
    %49 = vector.load %arg9[%c0_56, %c8_57, %c0_58] : memref<2x24x32xbf16, #tpu.memory_space<vmem>>, vector<2x16x32xbf16>
    %50 = tpu.concatenate %47, %48, %49, %3 in 2 : vector<2x16x32xbf16>, vector<2x16x32xbf16>, vector<2x16x32xbf16>, vector<2x16x32xbf16> -> vector<2x16x128xbf16>
    %51 = vector.shape_cast %50 : vector<2x16x128xbf16> to vector<32x128xbf16>
    %cst_59 = arith.constant dense<0.000000e+00> : vector<32x32xf32>
    %52 = tpu.matmul %51, %42, %cst_59 {dimension_numbers = #tpu.dot_dimension_numbers<[1], [0], [0], [1], [0, 0, 1, 1], [], []>} : vector<32x128xbf16>, vector<128x32xbf16>, vector<32x32xf32> -> vector<32x32xf32>
    %53 = vector.broadcast %44 : vector<1x32xf32> to vector<32x32xf32>
    %54 = arith.addf %52, %53 : vector<32x32xf32>
    %cst_60 = arith.constant 0.000000e+00 : f32
    %55 = vector.broadcast %cst_60 : f32 to vector<32x32xf32>
    %56 = arith.maximumf %54, %55 : vector<32x32xf32>
    %57 = vector.shape_cast %56 : vector<32x32xf32> to vector<2x16x32xf32>
    %c3 = arith.constant 3 : index
    %c0_61 = arith.constant 0 : index
    %c0_62 = arith.constant 0 : index
    %58 = vector.load %arg2[%c3, %c0_61, %c0_62] : memref<4x128x32xbf16, #tpu.memory_space<vmem>>, vector<1x128x32xbf16>
    %59 = vector.shape_cast %58 : vector<1x128x32xbf16> to vector<128x32xbf16>
    %c3_63 = arith.constant 3 : index
    %c0_64 = arith.constant 0 : index
    %c0_65 = arith.constant 0 : index
    %60 = vector.load %arg3[%c3_63, %c0_64, %c0_65] : memref<4x1x32xf32, #tpu.memory_space<vmem>>, vector<1x1x32xf32>
    %61 = vector.shape_cast %60 : vector<1x1x32xf32> to vector<1x32xf32>
    %62 = arith.truncf %57 : vector<2x16x32xf32> to vector<2x16x32xbf16>
    %c0_66 = arith.constant 0 : index
    %c8_67 = arith.constant 8 : index
    %c0_68 = arith.constant 0 : index
    %63 = vector.load %arg9[%c0_66, %c8_67, %c0_68] : memref<2x24x32xbf16, #tpu.memory_space<vmem>>, vector<2x16x32xbf16>
    tpu.vector_store %arg9[%c0_66, %c8_67, %c0_68], %62 {strides = array<i32>} : memref<2x24x32xbf16, #tpu.memory_space<vmem>>, vector<2x16x32xbf16>,
    %c0_69 = arith.constant 0 : index
    %c4_70 = arith.constant 4 : index
    %c0_71 = arith.constant 0 : index
    %64 = vector.load %arg9[%c0_69, %c4_70, %c0_71] : memref<2x24x32xbf16, #tpu.memory_space<vmem>>, vector<2x16x32xbf16>
    %c0_72 = arith.constant 0 : index
    %c6_73 = arith.constant 6 : index
    %c0_74 = arith.constant 0 : index
    %65 = vector.load %arg9[%c0_72, %c6_73, %c0_74] : memref<2x24x32xbf16, #tpu.memory_space<vmem>>, vector<2x16x32xbf16>
    %c0_75 = arith.constant 0 : index
    %c8_76 = arith.constant 8 : index
    %c0_77 = arith.constant 0 : index
    %66 = vector.load %arg9[%c0_75, %c8_76, %c0_77] : memref<2x24x32xbf16, #tpu.memory_space<vmem>>, vector<2x16x32xbf16>
    %67 = tpu.concatenate %64, %65, %66, %3 in 2 : vector<2x16x32xbf16>, vector<2x16x32xbf16>, vector<2x16x32xbf16>, vector<2x16x32xbf16> -> vector<2x16x128xbf16>
    %68 = vector.shape_cast %67 : vector<2x16x128xbf16> to vector<32x128xbf16>
    %cst_78 = arith.constant dense<0.000000e+00> : vector<32x32xf32>
    %69 = tpu.matmul %68, %59, %cst_78 {dimension_numbers = #tpu.dot_dimension_numbers<[1], [0], [0], [1], [0, 0, 1, 1], [], []>} : vector<32x128xbf16>, vector<128x32xbf16>, vector<32x32xf32> -> vector<32x32xf32>
    %70 = vector.broadcast %61 : vector<1x32xf32> to vector<32x32xf32>
    %71 = arith.addf %69, %70 : vector<32x32xf32>
    %cst_79 = arith.constant 0.000000e+00 : f32
    %72 = vector.broadcast %cst_79 : f32 to vector<32x32xf32>
    %73 = arith.maximumf %71, %72 : vector<32x32xf32>
    %74 = vector.shape_cast %73 : vector<32x32xf32> to vector<2x16x32xf32>
    %75 = arith.addf %74, %40 : vector<2x16x32xf32>
    %cst_80 = arith.constant 0.000000e+00 : f32
    %76 = vector.broadcast %cst_80 : f32 to vector<2x16x32xf32>
    %77 = arith.maximumf %75, %76 : vector<2x16x32xf32>
    %78 = vector.extract_strided_slice %77 {offsets = [0, 15, 0], sizes = [2, 1, 32], strides = [1, 1, 1]} : vector<2x16x32xf32> to vector<2x1x32xf32>
    %79 = vector.shape_cast %78 : vector<2x1x32xf32> to vector<2x32xf32>
    %80 = arith.truncf %79 : vector<2x32xf32> to vector<2x32xbf16>
    %c0_81 = arith.constant 0 : index
    %c0_82 = arith.constant 0 : index
    %81 = vector.load %arg4[%c0_81, %c0_82] : memref<32x16xbf16, #tpu.memory_space<vmem>>, vector<32x16xbf16>
    %cst_83 = arith.constant dense<0.000000e+00> : vector<2x16xf32>
    %82 = tpu.matmul %80, %81, %cst_83 {dimension_numbers = #tpu.dot_dimension_numbers<[1], [0], [0], [1], [0, 0, 1, 1], [], []>} : vector<2x32xbf16>, vector<32x16xbf16>, vector<2x16xf32> -> vector<2x16xf32>
    %c0_84 = arith.constant 0 : index
    %c0_85 = arith.constant 0 : index
    %83 = vector.load %arg5[%c0_84, %c0_85] : memref<1x16xf32, #tpu.memory_space<vmem>>, vector<1x16xf32>
    %84 = vector.broadcast %83 : vector<1x16xf32> to vector<2x16xf32>
    %85 = arith.addf %82, %84 : vector<2x16xf32>
    %cst_86 = arith.constant 0.000000e+00 : f32
    %86 = vector.broadcast %cst_86 : f32 to vector<2x16xf32>
    %87 = arith.maximumf %85, %86 : vector<2x16xf32>
    %c0_87 = arith.constant 0 : index
    %c0_88 = arith.constant 0 : index
    %88 = vector.load %arg6[%c0_87, %c0_88] : memref<1x16xf32, #tpu.memory_space<vmem>>, vector<1x16xf32>
    %89 = vector.broadcast %88 : vector<1x16xf32> to vector<2x16xf32>
    %90 = arith.mulf %87, %89 : vector<2x16xf32>
    %cst_89 = arith.constant dense<0.000000e+00> : vector<2xf32>
    %91 = vector.multi_reduction <add>, %90, %cst_89 [1] : vector<2x16xf32> to vector<2xf32>
    %92 = vector.shape_cast %91 : vector<2xf32> to vector<2x1xf32>
    %c0_90 = arith.constant 0 : index
    %93 = memref.load %arg7[%c0_90] : memref<1xf32, #tpu.memory_space<smem>>
    %94 = vector.broadcast %93 : f32 to vector<2x1xf32>
    %95 = arith.addf %92, %94 : vector<2x1xf32>
    %96 = vector.shape_cast %95 : vector<2x1xf32> to vector<1x2xf32>
    %c0_91 = arith.constant 0 : index
    %c0_92 = arith.constant 0 : index
    %c0_93 = arith.constant 0 : index
    %97 = vector.load %arg8[%c0_91, %c0_92, %c0_93] : memref<1x1x2xf32, #tpu.memory_space<vmem>>, vector<1x1x2xf32>
    %98 = vector.shape_cast %97 : vector<1x1x2xf32> to vector<1x2xf32>
    %99 = vector.shape_cast %96 : vector<1x2xf32> to vector<1x1x2xf32>
    tpu.vector_store %arg8[%c0_91, %c0_92, %c0_93], %99 {strides = array<i32>} : memref<1x1x2xf32, #tpu.memory_space<vmem>>, vector<1x1x2xf32>,
    return
  }
  func.func @transform_0(%arg0: i32) -> (i32, i32, i32) {
    %c0_i32 = arith.constant 0 : i32
    %c0_i32_0 = arith.constant 0 : i32
    %c0_i32_1 = arith.constant 0 : i32
    return %arg0, %c0_i32, %c0_i32_0 : i32, i32, i32
  }
  func.func @transform_1(%arg0: i32) -> (i32, i32, i32) {
    %c0_i32 = arith.constant 0 : i32
    %c0_i32_0 = arith.constant 0 : i32
    %c0_i32_1 = arith.constant 0 : i32
    %c0_i32_2 = arith.constant 0 : i32
    return %c0_i32, %c0_i32_0, %c0_i32_1 : i32, i32, i32
  }
  func.func @transform_2(%arg0: i32) -> (i32, i32, i32) {
    %c0_i32 = arith.constant 0 : i32
    %c0_i32_0 = arith.constant 0 : i32
    %c0_i32_1 = arith.constant 0 : i32
    %c0_i32_2 = arith.constant 0 : i32
    return %c0_i32, %c0_i32_0, %c0_i32_1 : i32, i32, i32
  }
  func.func @transform_3(%arg0: i32) -> (i32, i32) {
    %c0_i32 = arith.constant 0 : i32
    %c0_i32_0 = arith.constant 0 : i32
    %c0_i32_1 = arith.constant 0 : i32
    return %c0_i32, %c0_i32_0 : i32, i32
  }
  func.func @transform_4(%arg0: i32) -> (i32, i32) {
    %c0_i32 = arith.constant 0 : i32
    %c0_i32_0 = arith.constant 0 : i32
    %c0_i32_1 = arith.constant 0 : i32
    return %c0_i32, %c0_i32_0 : i32, i32
  }
  func.func @transform_5(%arg0: i32) -> (i32, i32) {
    %c0_i32 = arith.constant 0 : i32
    %c0_i32_0 = arith.constant 0 : i32
    %c0_i32_1 = arith.constant 0 : i32
    return %c0_i32, %c0_i32_0 : i32, i32
  }
  func.func @transform_6(%arg0: i32) -> i32 {
    %c0_i32 = arith.constant 0 : i32
    %c0_i32_0 = arith.constant 0 : i32
    return %c0_i32 : i32
  }
  func.func @transform_7(%arg0: i32) -> (i32, i32, i32) {
    %c0_i32 = arith.constant 0 : i32
    %c0_i32_0 = arith.constant 0 : i32
    %c0_i32_1 = arith.constant 0 : i32
    return %arg0, %c0_i32, %c0_i32_0 : i32, i32, i32
  }
}

</mosaic_0001>

<llo_original>
// kernel: tpu_custom_call.1
$region0: #{tpu_custom_call.1}
  #allocation0 [shape = 'u32[]', space=smem, size = 0x4, offset = 0x4, fixed_abs, tag = 'smem constant byte address 0x4 - core index']
  #allocation1 [shape = 'u32[144,128]{1,0:T(1,128)}', space=vmem, size = 0x12000, scoped, tag = 'internal scratch']
  #allocation2 [shape = 'bf16[2,24,32]{2,1,0:T(8,128)(2,1)}', space=vmem, size = 0x3000, scoped, tag = 'scratch operand']
  #allocation3 [shape = 'f32[1]{0:T(128)S(6)}', space=smem, size = 0x200, scoped, tag = 'scoped memory for tpu_custom_call.1']
  %s0 = inlined_call_operand.vmem [shape: f32[2,16,32], index: 0, kind: input, shape index: {}]
  %s1 = inlined_call_operand.vmem [shape: bf16[4,128,32], index: 1, kind: input, shape index: {}]
  %s2 = inlined_call_operand.vmem [shape: f32[4,1,32], index: 2, kind: input, shape index: {}]
  %s3 = inlined_call_operand.vmem [shape: bf16[32,16], index: 3, kind: input, shape index: {}]
  %s4 = inlined_call_operand.vmem [shape: f32[1,16], index: 4, kind: input, shape index: {}]
  %s5 = inlined_call_operand.vmem [shape: f32[1,16], index: 5, kind: input, shape index: {}]
  %s6 = inlined_call_operand.<no memory space> [shape: f32[1], index: 6, kind: input, shape index: {}]
  %s7 = inlined_call_operand.hbm [shape: f32[1,1,2], index: 7, kind: output, shape index: {}]
  %s8 = sld [smem:[#allocation0]]
  $region38: #{tpu_custom_call.1} parent=0
    _
  %s10 = ssub.s32 1, %s8
  %s11 = scalar_select 0, %s10, %s8
  %12 = sst [smem:[#allocation3]] %s6
  $region1: #{tpu_custom_call.1} parent=0
    #allocation4 [shape = 'u8[512]{0}', space=vmem, size = 0x400, scoped, tag = 'output window, operand 0, single buffered']
    #allocation5 [shape = 's32[1]{0}', space=sflag, size = 0x4, scoped, tag = 'scoped memory for tpu_custom_call.1']
    %13 = vsyncpa [#allocation5], 0
    // Predicated region
    $region2: #{tpu_custom_call.1} parent=1 // pred_check
      _
    $region3: #{tpu_custom_call.1} parent=1 // pred_check_branch
      %15 = sbr.rel (0) target = $region5
    $region4: #{tpu_custom_call.1} parent=1 // pred_region
      _
    $region5: #{tpu_custom_call.1} parent=1 // pred_fallthru
      _
    // Predicated region
    $region6: #{tpu_custom_call.1} parent=1 // pred_check
      _
    $region7: #{tpu_custom_call.1} parent=1 // pred_check_branch
      %17 = sbr.rel (0) target = $region9
    $region8: #{tpu_custom_call.1} parent=1 // pred_region
      _
    $region9: #{tpu_custom_call.1} parent=1 // pred_fallthru
      _
    // Predicated region
    $region10: #{tpu_custom_call.1} parent=1 // pred_check
      _
    $region11: #{tpu_custom_call.1} parent=1 // pred_check_branch
      %19 = sbr.rel (0) target = $region13
    $region12: #{tpu_custom_call.1} parent=1 // pred_region
      _
    $region13: #{tpu_custom_call.1} parent=1 // pred_fallthru
      _
    // Predicated region
    $region14: #{tpu_custom_call.1} parent=1 // pred_check
      _
    $region15: #{tpu_custom_call.1} parent=1 // pred_check_branch
      %21 = sbr.rel (0) target = $region17
    $region16: #{tpu_custom_call.1} parent=1 // pred_region
      _
    $region17: #{tpu_custom_call.1} parent=1 // pred_fallthru
      _
    // Predicated region
    $region18: #{tpu_custom_call.1} parent=1 // pred_check
      _
    $region19: #{tpu_custom_call.1} parent=1 // pred_check_branch
      %23 = sbr.rel (0) target = $region21
    $region20: #{tpu_custom_call.1} parent=1 // pred_region
      _
    $region21: #{tpu_custom_call.1} parent=1 // pred_fallthru
      _
    // Predicated region
    $region22: #{tpu_custom_call.1} parent=1 // pred_check
      _
    $region23: #{tpu_custom_call.1} parent=1 // pred_check_branch
      %25 = sbr.rel (0) target = $region25
    $region24: #{tpu_custom_call.1} parent=1 // pred_region
      _
    $region25: #{tpu_custom_call.1} parent=1 // pred_fallthru
      _
    // Predicated region
    $region26: #{tpu_custom_call.1} parent=1 // pred_check
      _
    $region27: #{tpu_custom_call.1} parent=1 // pred_check_branch
      %27 = sbr.rel (0) target = $region29
    $region28: #{tpu_custom_call.1} parent=1 // pred_region
      _
    $region29: #{tpu_custom_call.1} parent=1 // pred_fallthru
      _
    %v29 = vld [vmem:[%s0] sm:$0xff]
    %v30 = vld [vmem:[%s0 + $0x8] sm:$0xff]
    %v31 = vld [vmem:[%s0 + $0x10] sm:$0xff]
    %v32 = vld [vmem:[%s0 + $0x18] sm:$0xff]
    %vm33 = vcmask 257024
    %34 = vst.msk [vmem:[#allocation2] sm:$0xf] %vm33, 0
    %35 = vst.msk [vmem:[#allocation2 + $0xc] sm:$0xf] %vm33, 0
    %v36 = vld [vmem:[%s1] sm:$0xf]
    %v37 = vld [vmem:[%s1 + $0x4] sm:$0xf]
    %v38 = vld [vmem:[%s1 + $0x8] sm:$0xf]
    %v39 = vld [vmem:[%s1 + $0xc] sm:$0xf]
    %v40 = vld [vmem:[%s1 + $0x10] sm:$0xf]
    %v41 = vld [vmem:[%s1 + $0x14] sm:$0xf]
    %v42 = vld [vmem:[%s1 + $0x18] sm:$0xf]
    %v43 = vld [vmem:[%s1 + $0x1c] sm:$0xf]
    %v44 = vld [vmem:[%s1 + $0x20] sm:$0xf]
    %v45 = vld [vmem:[%s1 + $0x24] sm:$0xf]
    %v46 = vld [vmem:[%s1 + $0x28] sm:$0xf]
    %v47 = vld [vmem:[%s1 + $0x2c] sm:$0xf]
    %v48 = vld [vmem:[%s1 + $0x30] sm:$0xf]
    %v49 = vld [vmem:[%s1 + $0x34] sm:$0xf]
    %v50 = vld [vmem:[%s1 + $0x38] sm:$0xf]
    %v51 = vld [vmem:[%s1 + $0x3c] sm:$0xf]
    %v52 = vld [vmem:[%s2] sm:$0x1]
    %v53 = vpack.c.bf16 %v30, %v29
    %v54 = vpack.c.bf16 %v32, %v31
    %v57 = vunpack.c.l.b16 %v53
    %v58 = vunpack.c.h.b16 %v53
    %v59 = vunpack.c.l.b16 %v54
    %v60 = vunpack.c.h.b16 %v54
    %v61 = vpack.c.b16 %v57, %v57
    %v62 = vpack.c.b16 %v58, %v58
    %v63 = vpack.c.b16 %v59, %v59
    %v64 = vpack.c.b16 %v60, %v60
    %69 = vst.msk [vmem:[#allocation2 + $0x4] sm:$0xf] %vm33, %v61
    %70 = vst.msk [vmem:[#allocation2 + $0x8] sm:$0xf] %vm33, %v62
    %71 = vst.msk [vmem:[#allocation2 + $0x10] sm:$0xf] %vm33, %v63
    %72 = vst.msk [vmem:[#allocation2 + $0x14] sm:$0xf] %vm33, %v64
    %v73 = vld [vmem:[#allocation2] sm:$0x8]
    %v74 = vld [vmem:[#allocation2 + $0x4] sm:$0xf]
    %v75 = vld [vmem:[#allocation2 + $0x8] sm:$0x7]
    %v76 = vld [vmem:[#allocation2 + $0xc] sm:$0x8]
    %v77 = vld [vmem:[#allocation2 + $0x10] sm:$0xf]
    %v78 = vld [vmem:[#allocation2 + $0x14] sm:$0x7]
    %v79 = vld [vmem:[#allocation2 + $0x8] sm:$0xf]
    %v80 = vld [vmem:[#allocation2 + $0x14] sm:$0xf]
    %v87 = vunpack.c.l.b16 %v73
    %v88 = vunpack.c.l.b16 %v74
    %v89 = vunpack.c.l.b16 %v75
    %v90 = vunpack.c.l.b16 %v76
    %v91 = vunpack.c.l.b16 %v77
    %v92 = vunpack.c.l.b16 %v78
    %v93 = vpack.c.b16 %v88, %v87
    %v94 = vpack.c.b16 %v89, %v89
    %v95 = vpack.c.b16 %v91, %v90
    %v96 = vpack.c.b16 %v92, %v92
    %v99 = vunpack.c.l.b16 %v79
    %v100 = vunpack.c.l.b16 %v80
    %v101 = vpack.c.b16 %v99, %v99
    %v102 = vpack.c.b16 %v100, %v100
    %vm103 = vsmask.f32 7424
    %v105 = vshrl.u32 %v93, 16
    %v107 = vshll.u32 %v93, 16
    %v109 = vrot.slane %v107, 1
    %v110 = vor.u32 %v105, %v109
    %v112 = vshll.u32 %v101, 16
    %v114 = vrot.slane %v112, 1
    %v115 = vsel %vm103, %v110, %v114
    %v116 = vshrl.u32 %v101, 16
    %v118 = vor.u32 %v116, %v114
    %v120 = vshrl.u32 %v95, 16
    %v122 = vshll.u32 %v95, 16
    %v124 = vrot.slane %v122, 1
    %v125 = vor.u32 %v120, %v124
    %v127 = vshll.u32 %v102, 16
    %v129 = vrot.slane %v127, 1
    %v130 = vsel %vm103, %v125, %v129
    %v131 = vshrl.u32 %v102, 16
    %v133 = vor.u32 %v131, %v129
    %134 = vrot.lane.b32.xlu0 %v115, 32
    %v135 = vpop.permute.xlu0 %134
    %136 = vrot.lane.b32.xlu0 %v118, 32
    %v137 = vpop.permute.xlu0 %136
    %138 = vrot.lane.b32.xlu0 %v130, 32
    %v139 = vpop.permute.xlu0 %138
    %140 = vrot.lane.b32.xlu0 %v133, 32
    %v141 = vpop.permute.xlu0 %140
    %v142 = vpack.c.b16 %v99, %v88
    %v143 = vpack.c.b16 %v100, %v91
    %v144 = vrot.slane %v142, 5
    %v145 = vrot.slane %v143, 5
    %146 = vrot.lane.b32.xlu0 %v144, 64
    %v147 = vpop.permute.xlu0 %146
    %148 = vrot.lane.b32.xlu0 %v145, 64
    %v149 = vpop.permute.xlu0 %148
    %vm150 = vcmask 261120
    %v152 = vsel %vm150, %v93, %v135
    %v155 = vsel %vm150, %v94, %v137
    %v157 = vsel %vm150, %v95, %v139
    %v160 = vsel %vm150, %v96, %v141
    %vm161 = vcmask 523264
    %v163 = vsel %vm161, %v152, %v147
    %v164 = vsel %vm161, %v155, %v147
    %v166 = vsel %vm161, %v157, %v149
    %v167 = vsel %vm161, %v160, %v149
    %vm168 = vcmask 785408
    %v170 = vsel %vm168, %v163, 0
    %v171 = vsel %vm168, %v164, 0
    %v172 = vsel %vm168, %v166, 0
    %v173 = vsel %vm168, %v167, 0
    %vm178 = vcmask 1044480
    %v179 = vrot.slane %v170, 3
    %v180 = vrot.slane %v171, 3
    %v181 = vsel %vm178, %v179, %v180
    %v182 = vrot.slane %v172, 3
    %v183 = vrot.slane %v173, 3
    %v184 = vsel %vm178, %v182, %v183
    %v188 = vlaneseq
    %v189 = vshrl.u32 %v188, 7
    %v190 = vsub.s32 0, %v189
    %v191 = vrot.slane %v52, %v190
    %v209 = vunpack.c.l.b16 %v36
    %v210 = vunpack.c.l.b16 %v37
    %v211 = vunpack.c.l.b16 %v38
    %v212 = vunpack.c.l.b16 %v39
    %v213 = vunpack.c.l.b16 %v40
    %v214 = vunpack.c.l.b16 %v41
    %v215 = vunpack.c.l.b16 %v42
    %v216 = vunpack.c.l.b16 %v43
    %v217 = vunpack.c.l.b16 %v44
    %v218 = vunpack.c.l.b16 %v45
    %v219 = vunpack.c.l.b16 %v46
    %v220 = vunpack.c.l.b16 %v47
    %v221 = vunpack.c.l.b16 %v48
    %v222 = vunpack.c.l.b16 %v49
    %v223 = vunpack.c.l.b16 %v50
    %v224 = vunpack.c.l.b16 %v51
    %v225 = vpack.c.b16 %v210, %v209
    %v226 = vpack.c.b16 %v212, %v211
    %v227 = vpack.c.b16 %v214, %v213
    %v228 = vpack.c.b16 %v216, %v215
    %v229 = vpack.c.b16 %v218, %v217
    %v230 = vpack.c.b16 %v220, %v219
    %v231 = vpack.c.b16 %v222, %v221
    %v232 = vpack.c.b16 %v224, %v223
    %241 = vmatprep.subr.bf16.mxu0 0
    %242 = vmatpush1.bf16.msra.mxu0 %v225
    %243 = vmatprep.subr.bf16.mxu0 0
    %244 = vmatpush1.bf16.msra.mxu0 %v226
    %245 = vmatprep.subr.bf16.mxu0 0
    %246 = vmatpush1.bf16.msra.mxu0 %v227
    %247 = vmatprep.subr.bf16.mxu0 0
    %248 = vmatpush1.bf16.msra.mxu0 %v228
    %249 = vmatprep.subr.bf16.mxu0 0
    %250 = vmatpush1.bf16.msra.mxu0 %v229
    %251 = vmatprep.subr.bf16.mxu0 0
    %252 = vmatpush1.bf16.msra.mxu0 %v230
    %253 = vmatprep.subr.bf16.mxu0 0
    %254 = vmatpush1.bf16.msra.mxu0 %v231
    %255 = vmatprep.subr.bf16.mxu0 0
    %256 = vmatpush1.bf16.msra.mxu0 %v232
    %257 = vmatprep.subr.bf16.mxu0 0
    %258 = vmatpush1.bf16.msra.mxu0 0
    %259 = vmatprep.subr.bf16.mxu0 0
    %260 = vmatpush1.bf16.msra.mxu0 0
    %261 = vmatprep.subr.bf16.mxu0 0
    %262 = vmatpush1.bf16.msra.mxu0 0
    %263 = vmatprep.subr.bf16.mxu0 0
    %264 = vmatpush1.bf16.msra.mxu0 0
    %265 = vmatprep.subr.bf16.mxu0 0
    %266 = vmatpush1.bf16.msra.mxu0 0
    %267 = vmatprep.subr.bf16.mxu0 0
    %268 = vmatpush1.bf16.msra.mxu0 0
    %269 = vmatprep.subr.bf16.mxu0 0
    %270 = vmatpush1.bf16.msra.mxu0 0
    %271 = vmatprep.subr.bf16.mxu0 0
    %272 = vmatpush1.bf16.msra.mxu0 0
    %273 = vmatprep.mubr.bf16.mxu0 0
    %274 = vmatmul.mubr.bf16.gmra.mrb[0].mxu0 %v181
    %v275 = vpop.f32.mrb[0].mxu0
    %v276 = vadd.f32 %v191, %v275
    %v277 = vpop.f32.mrb[0].mxu0
    %v278 = vpop.f32.mrb[0].mxu0
    %v279 = vadd.f32 %v191, %v278
    %v280 = vpop.f32.mrb[0].mxu0
    %281 = vmatprep.mubr.bf16.mxu0 0
    %282 = vmatmul.mubr.bf16.gmra.mrb[0].mxu0 %v184
    %v283 = vpop.f32.mrb[0].mxu0
    %v284 = vadd.f32 %v191, %v283
    %v285 = vpop.f32.mrb[0].mxu0
    %v286 = vpop.f32.mrb[0].mxu0
    %v287 = vadd.f32 %v191, %v286
    %v288 = vpop.f32.mrb[0].mxu0
    %289 = vdwg.mxu0
    %v290 = vmax.f32 %v276, 0.0
    %v291 = vmax.f32 %v279, 0.0
    %v292 = vmax.f32 %v284, 0.0
    %v293 = vmax.f32 %v287, 0.0
    %s294 = scalar_lea.vmem %s1, 64
    %v295 = vld [vmem:[%s294] sm:$0xf]
    %v296 = vld [vmem:[%s294 + $0x4] sm:$0xf]
    %v297 = vld [vmem:[%s294 + $0x8] sm:$0xf]
    %v298 = vld [vmem:[%s294 + $0xc] sm:$0xf]
    %v299 = vld [vmem:[%s294 + $0x10] sm:$0xf]
    %v300 = vld [vmem:[%s294 + $0x14] sm:$0xf]
    %v301 = vld [vmem:[%s294 + $0x18] sm:$0xf]
    %v302 = vld [vmem:[%s294 + $0x1c] sm:$0xf]
    %v303 = vld [vmem:[%s294 + $0x20] sm:$0xf]
    %v304 = vld [vmem:[%s294 + $0x24] sm:$0xf]
    %v305 = vld [vmem:[%s294 + $0x28] sm:$0xf]
    %v306 = vld [vmem:[%s294 + $0x2c] sm:$0xf]
    %v307 = vld [vmem:[%s294 + $0x30] sm:$0xf]
    %v308 = vld [vmem:[%s294 + $0x34] sm:$0xf]
    %v309 = vld [vmem:[%s294 + $0x38] sm:$0xf]
    %v310 = vld [vmem:[%s294 + $0x3c] sm:$0xf]
    %s311 = scalar_lea.vmem %s2, 1
    %v312 = vld [vmem:[%s311] sm:$0x1]
    %v313 = vpack.c.bf16 %v291, %v290
    %v314 = vpack.c.bf16 %v293, %v292
    %v317 = vunpack.c.l.b16 %v313
    %v318 = vunpack.c.h.b16 %v313
    %v319 = vunpack.c.l.b16 %v314
    %v320 = vunpack.c.h.b16 %v314
    %v321 = vpack.c.b16 %v317, %v317
    %v322 = vpack.c.b16 %v318, %v318
    %v323 = vpack.c.b16 %v319, %v319
    %v324 = vpack.c.b16 %v320, %v320
    %329 = vst.msk [vmem:[#allocation2 + $0x4] sm:$0xf] %vm33, %v321
    %330 = vst.msk [vmem:[#allocation2 + $0x8] sm:$0xf] %vm33, %v322
    %331 = vst.msk [vmem:[#allocation2 + $0x10] sm:$0xf] %vm33, %v323
    %332 = vst.msk [vmem:[#allocation2 + $0x14] sm:$0xf] %vm33, %v324
    %v333 = vld [vmem:[#allocation2] sm:$0x8]
    %v334 = vld [vmem:[#allocation2 + $0x4] sm:$0xf]
    %v335 = vld [vmem:[#allocation2 + $0x8] sm:$0x7]
    %v336 = vld [vmem:[#allocation2 + $0xc] sm:$0x8]
    %v337 = vld [vmem:[#allocation2 + $0x10] sm:$0xf]
    %v338 = vld [vmem:[#allocation2 + $0x14] sm:$0x7]
    %v339 = vld [vmem:[#allocation2 + $0x8] sm:$0xf]
    %v340 = vld [vmem:[#allocation2 + $0x14] sm:$0xf]
    %v347 = vunpack.c.l.b16 %v333
    %v348 = vunpack.c.l.b16 %v334
    %v349 = vunpack.c.l.b16 %v335
    %v350 = vunpack.c.l.b16 %v336
    %v351 = vunpack.c.l.b16 %v337
    %v352 = vunpack.c.l.b16 %v338
    %v353 = vpack.c.b16 %v348, %v347
    %v354 = vpack.c.b16 %v349, %v349
    %v355 = vpack.c.b16 %v351, %v350
    %v356 = vpack.c.b16 %v352, %v352
    %v359 = vunpack.c.l.b16 %v339
    %v360 = vunpack.c.l.b16 %v340
    %v361 = vpack.c.b16 %v359, %v359
    %v362 = vpack.c.b16 %v360, %v360
    %v364 = vshrl.u32 %v353, 16
    %v366 = vshll.u32 %v353, 16
    %v368 = vrot.slane %v366, 1
    %v369 = vor.u32 %v364, %v368
    %v371 = vshll.u32 %v361, 16
    %v373 = vrot.slane %v371, 1
    %v374 = vsel %vm103, %v369, %v373
    %v375 = vshrl.u32 %v361, 16
    %v377 = vor.u32 %v375, %v373
    %v379 = vshrl.u32 %v355, 16
    %v381 = vshll.u32 %v355, 16
    %v383 = vrot.slane %v381, 1
    %v384 = vor.u32 %v379, %v383
    %v386 = vshll.u32 %v362, 16
    %v388 = vrot.slane %v386, 1
    %v389 = vsel %vm103, %v384, %v388
    %v390 = vshrl.u32 %v362, 16
    %v392 = vor.u32 %v390, %v388
    %393 = vrot.lane.b32.xlu0 %v374, 32
    %v394 = vpop.permute.xlu0 %393
    %395 = vrot.lane.b32.xlu0 %v377, 32
    %v396 = vpop.permute.xlu0 %395
    %397 = vrot.lane.b32.xlu0 %v389, 32
    %v398 = vpop.permute.xlu0 %397
    %399 = vrot.lane.b32.xlu0 %v392, 32
    %v400 = vpop.permute.xlu0 %399
    %v401 = vpack.c.b16 %v359, %v348
    %v402 = vpack.c.b16 %v360, %v351
    %v403 = vrot.slane %v401, 5
    %v404 = vrot.slane %v402, 5
    %405 = vrot.lane.b32.xlu0 %v403, 64
    %v406 = vpop.permute.xlu0 %405
    %407 = vrot.lane.b32.xlu0 %v404, 64
    %v408 = vpop.permute.xlu0 %407
    %v410 = vsel %vm150, %v353, %v394
    %v413 = vsel %vm150, %v354, %v396
    %v415 = vsel %vm150, %v355, %v398
    %v418 = vsel %vm150, %v356, %v400
    %v420 = vsel %vm161, %v410, %v406
    %v421 = vsel %vm161, %v413, %v406
    %v423 = vsel %vm161, %v415, %v408
    %v424 = vsel %vm161, %v418, %v408
    %v425 = vsel %vm168, %v420, 0
    %v426 = vsel %vm168, %v421, 0
    %v427 = vsel %vm168, %v423, 0
    %v428 = vsel %vm168, %v424, 0
    %v433 = vrot.slane %v425, 3
    %v434 = vrot.slane %v426, 3
    %v435 = vsel %vm178, %v433, %v434
    %v436 = vrot.slane %v427, 3
    %v437 = vrot.slane %v428, 3
    %v438 = vsel %vm178, %v436, %v437
    %v442 = vlaneseq
    %v443 = vshrl.u32 %v442, 7
    %v444 = vsub.s32 0, %v443
    %v445 = vrot.slane %v312, %v444
    %v463 = vunpack.c.l.b16 %v295
    %v464 = vunpack.c.l.b16 %v296
    %v465 = vunpack.c.l.b16 %v297
    %v466 = vunpack.c.l.b16 %v298
    %v467 = vunpack.c.l.b16 %v299
    %v468 = vunpack.c.l.b16 %v300
    %v469 = vunpack.c.l.b16 %v301
    %v470 = vunpack.c.l.b16 %v302
    %v471 = vunpack.c.l.b16 %v303
    %v472 = vunpack.c.l.b16 %v304
    %v473 = vunpack.c.l.b16 %v305
    %v474 = vunpack.c.l.b16 %v306
    %v475 = vunpack.c.l.b16 %v307
    %v476 = vunpack.c.l.b16 %v308
    %v477 = vunpack.c.l.b16 %v309
    %v478 = vunpack.c.l.b16 %v310
    %v479 = vpack.c.b16 %v464, %v463
    %v480 = vpack.c.b16 %v466, %v465
    %v481 = vpack.c.b16 %v468, %v467
    %v482 = vpack.c.b16 %v470, %v469
    %v483 = vpack.c.b16 %v472, %v471
    %v484 = vpack.c.b16 %v474, %v473
    %v485 = vpack.c.b16 %v476, %v475
    %v486 = vpack.c.b16 %v478, %v477
    %495 = vmatprep.subr.bf16.mxu0 0
    %496 = vmatpush1.bf16.msra.mxu0 %v479
    %497 = vmatprep.subr.bf16.mxu0 0
    %498 = vmatpush1.bf16.msra.mxu0 %v480
    %499 = vmatprep.subr.bf16.mxu0 0
    %500 = vmatpush1.bf16.msra.mxu0 %v481
    %501 = vmatprep.subr.bf16.mxu0 0
    %502 = vmatpush1.bf16.msra.mxu0 %v482
    %503 = vmatprep.subr.bf16.mxu0 0
    %504 = vmatpush1.bf16.msra.mxu0 %v483
    %505 = vmatprep.subr.bf16.mxu0 0
    %506 = vmatpush1.bf16.msra.mxu0 %v484
    %507 = vmatprep.subr.bf16.mxu0 0
    %508 = vmatpush1.bf16.msra.mxu0 %v485
    %509 = vmatprep.subr.bf16.mxu0 0
    %510 = vmatpush1.bf16.msra.mxu0 %v486
    %511 = vmatprep.subr.bf16.mxu0 0
    %512 = vmatpush1.bf16.msra.mxu0 0
    %513 = vmatprep.subr.bf16.mxu0 0
    %514 = vmatpush1.bf16.msra.mxu0 0
    %515 = vmatprep.subr.bf16.mxu0 0
    %516 = vmatpush1.bf16.msra.mxu0 0
    %517 = vmatprep.subr.bf16.mxu0 0
    %518 = vmatpush1.bf16.msra.mxu0 0
    %519 = vmatprep.subr.bf16.mxu0 0
    %520 = vmatpush1.bf16.msra.mxu0 0
    %521 = vmatprep.subr.bf16.mxu0 0
    %522 = vmatpush1.bf16.msra.mxu0 0
    %523 = vmatprep.subr.bf16.mxu0 0
    %524 = vmatpush1.bf16.msra.mxu0 0
    %525 = vmatprep.subr.bf16.mxu0 0
    %526 = vmatpush1.bf16.msra.mxu0 0
    %527 = vmatprep.mubr.bf16.mxu0 0
    %528 = vmatmul.mubr.bf16.gmra.mrb[0].mxu0 %v435
    %v529 = vpop.f32.mrb[0].mxu0
    %v530 = vadd.f32 %v445, %v529
    %v531 = vpop.f32.mrb[0].mxu0
    %v532 = vpop.f32.mrb[0].mxu0
    %v533 = vadd.f32 %v445, %v532
    %v534 = vpop.f32.mrb[0].mxu0
    %535 = vmatprep.mubr.bf16.mxu0 0
    %536 = vmatmul.mubr.bf16.gmra.mrb[0].mxu0 %v438
    %v537 = vpop.f32.mrb[0].mxu0
    %v538 = vadd.f32 %v445, %v537
    %v539 = vpop.f32.mrb[0].mxu0
    %v540 = vpop.f32.mrb[0].mxu0
    %v541 = vadd.f32 %v445, %v540
    %v542 = vpop.f32.mrb[0].mxu0
    %543 = vdwg.mxu0
    %v544 = vmax.f32 %v530, 0.0
    %v545 = vmax.f32 %v533, 0.0
    %v546 = vmax.f32 %v538, 0.0
    %v547 = vmax.f32 %v541, 0.0
    %v548 = vadd.f32 %v544, %v29
    %v549 = vadd.f32 %v545, %v30
    %v550 = vadd.f32 %v546, %v31
    %v551 = vadd.f32 %v547, %v32
    %v552 = vmax.f32 %v548, 0.0
    %v553 = vmax.f32 %v549, 0.0
    %v554 = vmax.f32 %v550, 0.0
    %v555 = vmax.f32 %v551, 0.0
    %s556 = scalar_lea.vmem %s1, 128
    %v557 = vld [vmem:[%s556] sm:$0xf]
    %v558 = vld [vmem:[%s556 + $0x4] sm:$0xf]
    %v559 = vld [vmem:[%s556 + $0x8] sm:$0xf]
    %v560 = vld [vmem:[%s556 + $0xc] sm:$0xf]
    %v561 = vld [vmem:[%s556 + $0x10] sm:$0xf]
    %v562 = vld [vmem:[%s556 + $0x14] sm:$0xf]
    %v563 = vld [vmem:[%s556 + $0x18] sm:$0xf]
    %v564 = vld [vmem:[%s556 + $0x1c] sm:$0xf]
    %v565 = vld [vmem:[%s556 + $0x20] sm:$0xf]
    %v566 = vld [vmem:[%s556 + $0x24] sm:$0xf]
    %v567 = vld [vmem:[%s556 + $0x28] sm:$0xf]
    %v568 = vld [vmem:[%s556 + $0x2c] sm:$0xf]
    %v569 = vld [vmem:[%s556 + $0x30] sm:$0xf]
    %v570 = vld [vmem:[%s556 + $0x34] sm:$0xf]
    %v571 = vld [vmem:[%s556 + $0x38] sm:$0xf]
    %v572 = vld [vmem:[%s556 + $0x3c] sm:$0xf]
    %s573 = scalar_lea.vmem %s2, 2
    %v574 = vld [vmem:[%s573] sm:$0x1]
    %v575 = vpack.c.bf16 %v553, %v552
    %v576 = vpack.c.bf16 %v555, %v554
    %v579 = vunpack.c.l.b16 %v575
    %v580 = vunpack.c.h.b16 %v575
    %v581 = vunpack.c.l.b16 %v576
    %v582 = vunpack.c.h.b16 %v576
    %v583 = vpack.c.b16 %v579, %v579
    %v584 = vpack.c.b16 %v580, %v580
    %v585 = vpack.c.b16 %v581, %v581
    %v586 = vpack.c.b16 %v582, %v582
    %591 = vst.msk [vmem:[#allocation2 + $0x4] sm:$0xf] %vm33, %v583
    %592 = vst.msk [vmem:[#allocation2 + $0x8] sm:$0xf] %vm33, %v584
    %593 = vst.msk [vmem:[#allocation2 + $0x10] sm:$0xf] %vm33, %v585
    %594 = vst.msk [vmem:[#allocation2 + $0x14] sm:$0xf] %vm33, %v586
    %v595 = vld [vmem:[#allocation2] sm:$0xc]
    %v596 = vld [vmem:[#allocation2 + $0x4] sm:$0xf]
    %v597 = vld [vmem:[#allocation2 + $0x8] sm:$0x3]
    %v598 = vld [vmem:[#allocation2 + $0xc] sm:$0xc]
    %v599 = vld [vmem:[#allocation2 + $0x10] sm:$0xf]
    %v600 = vld [vmem:[#allocation2 + $0x14] sm:$0x3]
    %v601 = vld [vmem:[#allocation2] sm:$0x8]
    %v602 = vld [vmem:[#allocation2 + $0x8] sm:$0x7]
    %v603 = vld [vmem:[#allocation2 + $0xc] sm:$0x8]
    %v604 = vld [vmem:[#allocation2 + $0x14] sm:$0x7]
    %v605 = vld [vmem:[#allocation2 + $0x8] sm:$0xf]
    %v606 = vld [vmem:[#allocation2 + $0x14] sm:$0xf]
    %v613 = vunpack.c.l.b16 %v595
    %v614 = vunpack.c.l.b16 %v596
    %v615 = vunpack.c.l.b16 %v597
    %v616 = vunpack.c.l.b16 %v598
    %v617 = vunpack.c.l.b16 %v599
    %v618 = vunpack.c.l.b16 %v600
    %v619 = vpack.c.b16 %v614, %v613
    %v620 = vpack.c.b16 %v615, %v615
    %v621 = vpack.c.b16 %v617, %v616
    %v622 = vpack.c.b16 %v618, %v618
    %v627 = vunpack.c.l.b16 %v601
    %v628 = vunpack.c.l.b16 %v602
    %v629 = vunpack.c.l.b16 %v603
    %v630 = vunpack.c.l.b16 %v604
    %v631 = vpack.c.b16 %v614, %v627
    %v632 = vpack.c.b16 %v628, %v628
    %v633 = vpack.c.b16 %v617, %v629
    %v634 = vpack.c.b16 %v630, %v630
    %vm635 = vcmask 1046528
    %v636 = vrot.slane %v631, 1
    %v637 = vrot.slane %v632, 1
    %v638 = vsel %vm635, %v636, %v637
    %v639 = vrot.slane %v633, 1
    %v640 = vrot.slane %v634, 1
    %v641 = vsel %vm635, %v639, %v640
    %642 = vrot.lane.b32.xlu0 %v638, 32
    %v643 = vpop.permute.xlu0 %642
    %644 = vrot.lane.b32.xlu0 %v637, 32
    %v645 = vpop.permute.xlu0 %644
    %646 = vrot.lane.b32.xlu0 %v641, 32
    %v647 = vpop.permute.xlu0 %646
    %648 = vrot.lane.b32.xlu0 %v640, 32
    %v649 = vpop.permute.xlu0 %648
    %v652 = vunpack.c.l.b16 %v605
    %v653 = vunpack.c.l.b16 %v606
    %v654 = vpack.c.b16 %v652, %v614
    %v655 = vpack.c.b16 %v653, %v617
    %v656 = vrot.slane %v654, 6
    %v657 = vrot.slane %v655, 6
    %658 = vrot.lane.b32.xlu0 %v656, 64
    %v659 = vpop.permute.xlu0 %658
    %660 = vrot.lane.b32.xlu0 %v657, 64
    %v661 = vpop.permute.xlu0 %660
    %v664 = vsel %vm150, %v619, %v643
    %v667 = vsel %vm150, %v620, %v645
    %v670 = vsel %vm150, %v621, %v647
    %v673 = vsel %vm150, %v622, %v649
    %v675 = vsel %vm161, %v664, %v659
    %v676 = vsel %vm161, %v667, %v659
    %v678 = vsel %vm161, %v670, %v661
    %v679 = vsel %vm161, %v673, %v661
    %v680 = vsel %vm168, %v675, 0
    %v681 = vsel %vm168, %v676, 0
    %v682 = vsel %vm168, %v678, 0
    %v683 = vsel %vm168, %v679, 0
    %vm688 = vcmask 1045504
    %v689 = vrot.slane %v680, 2
    %v690 = vrot.slane %v681, 2
    %v691 = vsel %vm688, %v689, %v690
    %v692 = vrot.slane %v682, 2
    %v693 = vrot.slane %v683, 2
    %v694 = vsel %vm688, %v692, %v693
    %v698 = vlaneseq
    %v699 = vshrl.u32 %v698, 7
    %v700 = vsub.s32 0, %v699
    %v701 = vrot.slane %v574, %v700
    %v719 = vunpack.c.l.b16 %v557
    %v720 = vunpack.c.l.b16 %v558
    %v721 = vunpack.c.l.b16 %v559
    %v722 = vunpack.c.l.b16 %v560
    %v723 = vunpack.c.l.b16 %v561
    %v724 = vunpack.c.l.b16 %v562
    %v725 = vunpack.c.l.b16 %v563
    %v726 = vunpack.c.l.b16 %v564
    %v727 = vunpack.c.l.b16 %v565
    %v728 = vunpack.c.l.b16 %v566
    %v729 = vunpack.c.l.b16 %v567
    %v730 = vunpack.c.l.b16 %v568
    %v731 = vunpack.c.l.b16 %v569
    %v732 = vunpack.c.l.b16 %v570
    %v733 = vunpack.c.l.b16 %v571
    %v734 = vunpack.c.l.b16 %v572
    %v735 = vpack.c.b16 %v720, %v719
    %v736 = vpack.c.b16 %v722, %v721
    %v737 = vpack.c.b16 %v724, %v723
    %v738 = vpack.c.b16 %v726, %v725
    %v739 = vpack.c.b16 %v728, %v727
    %v740 = vpack.c.b16 %v730, %v729
    %v741 = vpack.c.b16 %v732, %v731
    %v742 = vpack.c.b16 %v734, %v733
    %751 = vmatprep.subr.bf16.mxu0 0
    %752 = vmatpush1.bf16.msra.mxu0 %v735
    %753 = vmatprep.subr.bf16.mxu0 0
    %754 = vmatpush1.bf16.msra.mxu0 %v736
    %755 = vmatprep.subr.bf16.mxu0 0
    %756 = vmatpush1.bf16.msra.mxu0 %v737
    %757 = vmatprep.subr.bf16.mxu0 0
    %758 = vmatpush1.bf16.msra.mxu0 %v738
    %759 = vmatprep.subr.bf16.mxu0 0
    %760 = vmatpush1.bf16.msra.mxu0 %v739
    %761 = vmatprep.subr.bf16.mxu0 0
    %762 = vmatpush1.bf16.msra.mxu0 %v740
    %763 = vmatprep.subr.bf16.mxu0 0
    %764 = vmatpush1.bf16.msra.mxu0 %v741
    %765 = vmatprep.subr.bf16.mxu0 0
    %766 = vmatpush1.bf16.msra.mxu0 %v742
    %767 = vmatprep.subr.bf16.mxu0 0
    %768 = vmatpush1.bf16.msra.mxu0 0
    %769 = vmatprep.subr.bf16.mxu0 0
    %770 = vmatpush1.bf16.msra.mxu0 0
    %771 = vmatprep.subr.bf16.mxu0 0
    %772 = vmatpush1.bf16.msra.mxu0 0
    %773 = vmatprep.subr.bf16.mxu0 0
    %774 = vmatpush1.bf16.msra.mxu0 0
    %775 = vmatprep.subr.bf16.mxu0 0
    %776 = vmatpush1.bf16.msra.mxu0 0
    %777 = vmatprep.subr.bf16.mxu0 0
    %778 = vmatpush1.bf16.msra.mxu0 0
    %779 = vmatprep.subr.bf16.mxu0 0
    %780 = vmatpush1.bf16.msra.mxu0 0
    %781 = vmatprep.subr.bf16.mxu0 0
    %782 = vmatpush1.bf16.msra.mxu0 0
    %783 = vmatprep.mubr.bf16.mxu0 0
    %784 = vmatmul.mubr.bf16.gmra.mrb[0].mxu0 %v691
    %v785 = vpop.f32.mrb[0].mxu0
    %v786 = vadd.f32 %v701, %v785
    %v787 = vpop.f32.mrb[0].mxu0
    %v788 = vpop.f32.mrb[0].mxu0
    %v789 = vadd.f32 %v701, %v788
    %v790 = vpop.f32.mrb[0].mxu0
    %791 = vmatprep.mubr.bf16.mxu0 0
    %792 = vmatmul.mubr.bf16.gmra.mrb[0].mxu0 %v694
    %v793 = vpop.f32.mrb[0].mxu0
    %v794 = vadd.f32 %v701, %v793
    %v795 = vpop.f32.mrb[0].mxu0
    %v796 = vpop.f32.mrb[0].mxu0
    %v797 = vadd.f32 %v701, %v796
    %v798 = vpop.f32.mrb[0].mxu0
    %799 = vdwg.mxu0
    %v800 = vmax.f32 %v786, 0.0
    %v801 = vmax.f32 %v789, 0.0
    %v802 = vmax.f32 %v794, 0.0
    %v803 = vmax.f32 %v797, 0.0
    %s804 = scalar_lea.vmem %s1, 192
    %v805 = vld [vmem:[%s804] sm:$0xf]
    %v806 = vld [vmem:[%s804 + $0x4] sm:$0xf]
    %v807 = vld [vmem:[%s804 + $0x8] sm:$0xf]
    %v808 = vld [vmem:[%s804 + $0xc] sm:$0xf]
    %v809 = vld [vmem:[%s804 + $0x10] sm:$0xf]
    %v810 = vld [vmem:[%s804 + $0x14] sm:$0xf]
    %v811 = vld [vmem:[%s804 + $0x18] sm:$0xf]
    %v812 = vld [vmem:[%s804 + $0x1c] sm:$0xf]
    %v813 = vld [vmem:[%s804 + $0x20] sm:$0xf]
    %v814 = vld [vmem:[%s804 + $0x24] sm:$0xf]
    %v815 = vld [vmem:[%s804 + $0x28] sm:$0xf]
    %v816 = vld [vmem:[%s804 + $0x2c] sm:$0xf]
    %v817 = vld [vmem:[%s804 + $0x30] sm:$0xf]
    %v818 = vld [vmem:[%s804 + $0x34] sm:$0xf]
    %v819 = vld [vmem:[%s804 + $0x38] sm:$0xf]
    %v820 = vld [vmem:[%s804 + $0x3c] sm:$0xf]
    %s821 = scalar_lea.vmem %s2, 3
    %v822 = vld [vmem:[%s821] sm:$0x1]
    %v823 = vpack.c.bf16 %v801, %v800
    %v824 = vpack.c.bf16 %v803, %v802
    %v827 = vunpack.c.l.b16 %v823
    %v828 = vunpack.c.h.b16 %v823
    %v829 = vunpack.c.l.b16 %v824
    %v830 = vunpack.c.h.b16 %v824
    %v831 = vpack.c.b16 %v827, %v827
    %v832 = vpack.c.b16 %v828, %v828
    %v833 = vpack.c.b16 %v829, %v829
    %v834 = vpack.c.b16 %v830, %v830
    %839 = vst.msk [vmem:[#allocation2 + $0x4] sm:$0xf] %vm33, %v831
    %840 = vst.msk [vmem:[#allocation2 + $0x8] sm:$0xf] %vm33, %v832
    %841 = vst.msk [vmem:[#allocation2 + $0x10] sm:$0xf] %vm33, %v833
    %842 = vst.msk [vmem:[#allocation2 + $0x14] sm:$0xf] %vm33, %v834
    %v843 = vld [vmem:[#allocation2] sm:$0xc]
    %v844 = vld [vmem:[#allocation2 + $0x4] sm:$0xf]
    %v845 = vld [vmem:[#allocation2 + $0x8] sm:$0x3]
    %v846 = vld [vmem:[#allocation2 + $0xc] sm:$0xc]
    %v847 = vld [vmem:[#allocation2 + $0x10] sm:$0xf]
    %v848 = vld [vmem:[#allocation2 + $0x14] sm:$0x3]
    %v849 = vld [vmem:[#allocation2] sm:$0x8]
    %v850 = vld [vmem:[#allocation2 + $0x8] sm:$0x7]
    %v851 = vld [vmem:[#allocation2 + $0xc] sm:$0x8]
    %v852 = vld [vmem:[#allocation2 + $0x14] sm:$0x7]
    %v853 = vld [vmem:[#allocation2 + $0x8] sm:$0xf]
    %v854 = vld [vmem:[#allocation2 + $0x14] sm:$0xf]
    %v861 = vunpack.c.l.b16 %v843
    %v862 = vunpack.c.l.b16 %v844
    %v863 = vunpack.c.l.b16 %v845
    %v864 = vunpack.c.l.b16 %v846
    %v865 = vunpack.c.l.b16 %v847
    %v866 = vunpack.c.l.b16 %v848
    %v867 = vpack.c.b16 %v862, %v861
    %v868 = vpack.c.b16 %v863, %v863
    %v869 = vpack.c.b16 %v865, %v864
    %v870 = vpack.c.b16 %v866, %v866
    %v875 = vunpack.c.l.b16 %v849
    %v876 = vunpack.c.l.b16 %v850
    %v877 = vunpack.c.l.b16 %v851
    %v878 = vunpack.c.l.b16 %v852
    %v879 = vpack.c.b16 %v862, %v875
    %v880 = vpack.c.b16 %v876, %v876
    %v881 = vpack.c.b16 %v865, %v877
    %v882 = vpack.c.b16 %v878, %v878
    %v883 = vrot.slane %v879, 1
    %v884 = vrot.slane %v880, 1
    %v885 = vsel %vm635, %v883, %v884
    %v886 = vrot.slane %v881, 1
    %v887 = vrot.slane %v882, 1
    %v888 = vsel %vm635, %v886, %v887
    %889 = vrot.lane.b32.xlu0 %v885, 32
    %v890 = vpop.permute.xlu0 %889
    %891 = vrot.lane.b32.xlu0 %v884, 32
    %v892 = vpop.permute.xlu0 %891
    %893 = vrot.lane.b32.xlu0 %v888, 32
    %v894 = vpop.permute.xlu0 %893
    %895 = vrot.lane.b32.xlu0 %v887, 32
    %v896 = vpop.permute.xlu0 %895
    %v899 = vunpack.c.l.b16 %v853
    %v900 = vunpack.c.l.b16 %v854
    %v901 = vpack.c.b16 %v899, %v862
    %v902 = vpack.c.b16 %v900, %v865
    %v903 = vrot.slane %v901, 6
    %v904 = vrot.slane %v902, 6
    %905 = vrot.lane.b32.xlu0 %v903, 64
    %v906 = vpop.permute.xlu0 %905
    %907 = vrot.lane.b32.xlu0 %v904, 64
    %v908 = vpop.permute.xlu0 %907
    %v911 = vsel %vm150, %v867, %v890
    %v914 = vsel %vm150, %v868, %v892
    %v917 = vsel %vm150, %v869, %v894
    %v920 = vsel %vm150, %v870, %v896
    %v922 = vsel %vm161, %v911, %v906
    %v923 = vsel %vm161, %v914, %v906
    %v925 = vsel %vm161, %v917, %v908
    %v926 = vsel %vm161, %v920, %v908
    %v927 = vsel %vm168, %v922, 0
    %v928 = vsel %vm168, %v923, 0
    %v929 = vsel %vm168, %v925, 0
    %v930 = vsel %vm168, %v926, 0
    %v935 = vrot.slane %v927, 2
    %v936 = vrot.slane %v928, 2
    %v937 = vsel %vm688, %v935, %v936
    %v938 = vrot.slane %v929, 2
    %v939 = vrot.slane %v930, 2
    %v940 = vsel %vm688, %v938, %v939
    %v944 = vlaneseq
    %v945 = vshrl.u32 %v944, 7
    %v946 = vsub.s32 0, %v945
    %v947 = vrot.slane %v822, %v946
    %v965 = vunpack.c.l.b16 %v805
    %v966 = vunpack.c.l.b16 %v806
    %v967 = vunpack.c.l.b16 %v807
    %v968 = vunpack.c.l.b16 %v808
    %v969 = vunpack.c.l.b16 %v809
    %v970 = vunpack.c.l.b16 %v810
    %v971 = vunpack.c.l.b16 %v811
    %v972 = vunpack.c.l.b16 %v812
    %v973 = vunpack.c.l.b16 %v813
    %v974 = vunpack.c.l.b16 %v814
    %v975 = vunpack.c.l.b16 %v815
    %v976 = vunpack.c.l.b16 %v816
    %v977 = vunpack.c.l.b16 %v817
    %v978 = vunpack.c.l.b16 %v818
    %v979 = vunpack.c.l.b16 %v819
    %v980 = vunpack.c.l.b16 %v820
    %v981 = vpack.c.b16 %v966, %v965
    %v982 = vpack.c.b16 %v968, %v967
    %v983 = vpack.c.b16 %v970, %v969
    %v984 = vpack.c.b16 %v972, %v971
    %v985 = vpack.c.b16 %v974, %v973
    %v986 = vpack.c.b16 %v976, %v975
    %v987 = vpack.c.b16 %v978, %v977
    %v988 = vpack.c.b16 %v980, %v979
    %997 = vmatprep.subr.bf16.mxu0 0
    %998 = vmatpush1.bf16.msra.mxu0 %v981
    %999 = vmatprep.subr.bf16.mxu0 0
    %1000 = vmatpush1.bf16.msra.mxu0 %v982
    %1001 = vmatprep.subr.bf16.mxu0 0
    %1002 = vmatpush1.bf16.msra.mxu0 %v983
    %1003 = vmatprep.subr.bf16.mxu0 0
    %1004 = vmatpush1.bf16.msra.mxu0 %v984
    %1005 = vmatprep.subr.bf16.mxu0 0
    %1006 = vmatpush1.bf16.msra.mxu0 %v985
    %1007 = vmatprep.subr.bf16.mxu0 0
    %1008 = vmatpush1.bf16.msra.mxu0 %v986
    %1009 = vmatprep.subr.bf16.mxu0 0
    %1010 = vmatpush1.bf16.msra.mxu0 %v987
    %1011 = vmatprep.subr.bf16.mxu0 0
    %1012 = vmatpush1.bf16.msra.mxu0 %v988
    %1013 = vmatprep.subr.bf16.mxu0 0
    %1014 = vmatpush1.bf16.msra.mxu0 0
    %1015 = vmatprep.subr.bf16.mxu0 0
    %1016 = vmatpush1.bf16.msra.mxu0 0
    %1017 = vmatprep.subr.bf16.mxu0 0
    %1018 = vmatpush1.bf16.msra.mxu0 0
    %1019 = vmatprep.subr.bf16.mxu0 0
    %1020 = vmatpush1.bf16.msra.mxu0 0
    %1021 = vmatprep.subr.bf16.mxu0 0
    %1022 = vmatpush1.bf16.msra.mxu0 0
    %1023 = vmatprep.subr.bf16.mxu0 0
    %1024 = vmatpush1.bf16.msra.mxu0 0
    %1025 = vmatprep.subr.bf16.mxu0 0
    %1026 = vmatpush1.bf16.msra.mxu0 0
    %1027 = vmatprep.subr.bf16.mxu0 0
    %1028 = vmatpush1.bf16.msra.mxu0 0
    %1029 = vmatprep.mubr.bf16.mxu0 0
    %1030 = vmatmul.mubr.bf16.gmra.mrb[0].mxu0 %v937
    %v1031 = vpop.f32.mrb[0].mxu0
    %v1032 = vpop.f32.mrb[0].mxu0
    %v1033 = vpop.f32.mrb[0].mxu0
    %v1034 = vadd.f32 %v947, %v1033
    %v1035 = vpop.f32.mrb[0].mxu0
    %1036 = vmatprep.mubr.bf16.mxu0 0
    %1037 = vmatmul.mubr.bf16.gmra.mrb[0].mxu0 %v940
    %v1038 = vpop.f32.mrb[0].mxu0
    %v1039 = vpop.f32.mrb[0].mxu0
    %v1040 = vpop.f32.mrb[0].mxu0
    %v1041 = vadd.f32 %v947, %v1040
    %v1042 = vpop.f32.mrb[0].mxu0
    %1043 = vdwg.mxu0
    %v1044 = vmax.f32 %v1034, 0.0
    %v1045 = vmax.f32 %v1041, 0.0
    %v1046 = vadd.f32 %v1044, %v553
    %v1047 = vadd.f32 %v1045, %v555
    %v1048 = vmax.f32 %v1046, 0.0
    %v1049 = vmax.f32 %v1047, 0.0
    %v1050 = vpack.c.bf16 %v1048, %v1048
    %v1051 = vpack.c.bf16 %v1049, %v1049
    %v1052 = vld [vmem:[%s3] sm:$0xf]
    %v1053 = vld [vmem:[%s3 + $0x4] sm:$0xf]
    %v1054 = vld [vmem:[%s3 + $0x8] sm:$0xf]
    %v1055 = vld [vmem:[%s3 + $0xc] sm:$0xf]
    %v1056 = vld [vmem:[%s4] sm:$0x1]
    %v1058 = vlaneseq
    %v1059 = vshrl.u32 %v1058, 7
    %v1060 = vsub.s32 0, %v1059
    %v1061 = vrot.slane %v1056, %v1060
    %v1065 = vunpack.c.l.b16 %v1050
    %v1066 = vunpack.c.l.b16 %v1051
    %v1067 = vrot.slane %v1065, 7
    %v1068 = vrot.slane %v1066, 6
    %vm1069 = vcmask 1041409
    %v1070 = vsel %vm1069, %v1068, %v1067
    %v1071 = vpack.c.b16 %v1070, %v1070
    %v1076 = vunpack.c.l.b16 %v1052
    %v1077 = vunpack.c.l.b16 %v1053
    %v1078 = vunpack.c.l.b16 %v1054
    %v1079 = vunpack.c.l.b16 %v1055
    %v1080 = vpack.c.b16 %v1077, %v1076
    %v1081 = vpack.c.b16 %v1079, %v1078
    %v1085 = vsel %vm150, %v1071, 0
    %1087 = vmatprep.subr.bf16.mxu0 0
    %1088 = vmatpush1.bf16.msra.mxu0 %v1080
    %1089 = vmatprep.subr.bf16.mxu0 0
    %1090 = vmatpush1.bf16.msra.mxu0 %v1081
    %1091 = vmatprep.subr.bf16.mxu0 0
    %1092 = vmatpush1.bf16.msra.mxu0 0
    %1093 = vmatprep.subr.bf16.mxu0 0
    %1094 = vmatpush1.bf16.msra.mxu0 0
    %1095 = vmatprep.subr.bf16.mxu0 0
    %1096 = vmatpush1.bf16.msra.mxu0 0
    %1097 = vmatprep.subr.bf16.mxu0 0
    %1098 = vmatpush1.bf16.msra.mxu0 0
    %1099 = vmatprep.subr.bf16.mxu0 0
    %1100 = vmatpush1.bf16.msra.mxu0 0
    %1101 = vmatprep.subr.bf16.mxu0 0
    %1102 = vmatpush1.bf16.msra.mxu0 0
    %1103 = vmatprep.subr.bf16.mxu0 0
    %1104 = vmatpush1.bf16.msra.mxu0 0
    %1105 = vmatprep.subr.bf16.mxu0 0
    %1106 = vmatpush1.bf16.msra.mxu0 0
    %1107 = vmatprep.subr.bf16.mxu0 0
    %1108 = vmatpush1.bf16.msra.mxu0 0
    %1109 = vmatprep.subr.bf16.mxu0 0
    %1110 = vmatpush1.bf16.msra.mxu0 0
    %1111 = vmatprep.subr.bf16.mxu0 0
    %1112 = vmatpush1.bf16.msra.mxu0 0
    %1113 = vmatprep.subr.bf16.mxu0 0
    %1114 = vmatpush1.bf16.msra.mxu0 0
    %1115 = vmatprep.subr.bf16.mxu0 0
    %1116 = vmatpush1.bf16.msra.mxu0 0
    %1117 = vmatprep.subr.bf16.mxu0 0
    %1118 = vmatpush1.bf16.msra.mxu0 0
    %1119 = vmatprep.mubr.bf16.mxu0 0
    %1120 = vmatmul.mubr.bf16.gmra.mrb[0].mxu0 %v1085
    %v1121 = vpop.f32.mrb[0].mxu0
    %v1122 = vadd.f32 %v1061, %v1121
    %v1123 = vpop.f32.mrb[0].mxu0
    %v1124 = vpop.f32.mrb[0].mxu0
    %v1125 = vpop.f32.mrb[0].mxu0
    %1126 = vdwg.mxu0
    %v1127 = vmax.f32 %v1122, 0.0
    %v1128 = vld [vmem:[%s5] sm:$0x1]
    %v1130 = vlaneseq
    %v1131 = vshrl.u32 %v1130, 7
    %v1132 = vsub.s32 0, %v1131
    %v1133 = vrot.slane %v1128, %v1132
    %v1135 = vmul.f32 %v1127, %v1133
    %vm1136 = vcmask 123904
    %v1137 = vsel %vm1136, %v1135, 0.0
    %1138 = vadd.xlane.f32.xlu0 %v1137
    %v1139 = vpop.xlane.xlu0 %1138
    %s1140 = sld [smem:[#allocation3]]
    %v1141 = vstv %s1140
    %v1142 = vadd.f32 %v1139, %v1141
    %v1144 = vlaneseq
    %v1145 = vand.u32 %v1144, 127
    %v1146 = vlaneseq
    %v1147 = vshrl.u32 %v1146, 7
    %v1148 = vsub.s32 %v1145, %v1147
    %v1149 = vrot.slane %v1142, %v1148
    %vm1151 = vcmask 8192
    %1152 = vst.msk [vmem:[#allocation4] sm:$0x1] %vm1151, %v1149
    // Predicated region
    $region30: #{tpu_custom_call.1} parent=1 // pred_check
      _
    $region31: #{tpu_custom_call.1} parent=1 // pred_check_branch
      %1154 = sbr.rel (0) target = $region33
    $region32: #{tpu_custom_call.1} parent=1 // pred_region
      %s1156 = ssub.s32 16, 16
      %1157 = vsyncadd [#allocation5], %s1156
      %s1159 = sshll.u32 [#allocation4], 4
      %s1160 = int_to_ptr.vmem [resolvable:$true] %s1159
      %1162 = dma.vmem_to_hbm [thread:$0]  %s1160, 16, %s7, [#allocation5]
    $region33: #{tpu_custom_call.1} parent=1 // pred_fallthru
      _
    // Predicated region
    $region34: #{tpu_custom_call.1} parent=1 // pred_check
      _
    $region35: #{tpu_custom_call.1} parent=1 // pred_check_branch
      %1164 = sbr.rel (0) target = $region37
    $region36: #{tpu_custom_call.1} parent=1 // pred_region
      %1165 = dma.done [#allocation5], 16
    $region37: #{tpu_custom_call.1} parent=1 // pred_fallthru
      _
    %1166 = vsyncpa [#allocation5], 1

</llo_original>
